<compile_context>
chip_gen: v7x
topology: tpu7x:2x2x1
jax: 0.10.0
libtpu: 0.0.40
codegen_flags: <defaults>
</compile_context>

<pallas_src>
import inspect

import jax
import jax.numpy as jnp
from jax.experimental import pallas as pl
from jax.experimental.pallas import tpu as pltpu


def _round_up(v, m):
    return ((v + m - 1) // m) * m


def _physical_vmem_bytes():
    """Per-TensorCore VMEM capacity; conservative fallback works on v5e/v6e/v7x."""
    try:
        info = pltpu.get_tpu_info()
        cap = int(getattr(info, "vmem_capacity_bytes", 0) or 0)
        if cap > 0:
            return cap
    except Exception:
        pass
    return 64 << 20  # v7x per-TC VMEM; safe lower bound for v5e/v6e too


try:
    _HAS_PIPELINE_MODE = (
        hasattr(pl, "Buffered")
        and "pipeline_mode" in inspect.signature(pl.BlockSpec).parameters
    )
except (TypeError, ValueError):
    _HAS_PIPELINE_MODE = False


def _linear_kernel(x_ref, wt_ref, b_ref, o_ref):
    # x_ref: [TM, F], wt_ref: [F, TC], b_ref: [1, TC], o_ref: [TM, TC]
    acc = jnp.dot(x_ref[...], wt_ref[...], preferred_element_type=jnp.float32)
    acc = acc + b_ref[...].astype(jnp.float32)  # bias broadcast over rows
    o_ref[...] = acc.astype(o_ref.dtype)


def stream_classification_head_forward(x, weight, bias, *, compute_dtype=None):
    """y = x @ weight.T + bias  (PyTorch nn.Linear semantics).

    x:      [..., F]
    weight: [C, F]   (PyTorch layout; transposed once on the host)
    bias:   [C]
    compute_dtype: optionally cast x / weight to e.g. bf16 (f32 accumulation
        kept); output dtype stays x.dtype.
    returns [..., C]
    """
    *lead, F = x.shape
    C = weight.shape[0]
    n = 1
    for d in lead:
        n *= d

    out_dtype = x.dtype
    if n == 0:  # degenerate empty batch — nothing to launch
        return jnp.zeros((*lead, C), dtype=out_dtype)

    x2d = x.reshape(n, F)
    wt = weight.T  # [F, C] — one-time host transpose of a small parameter
    if compute_dtype is not None:
        x2d = x2d.astype(compute_dtype)
        wt = wt.astype(compute_dtype)
    b2d = bias.reshape(1, C)

    x_bytes = jnp.dtype(x2d.dtype).itemsize
    w_bytes = jnp.dtype(wt.dtype).itemsize
    o_bytes = jnp.dtype(out_dtype).itemsize

    # ---- per-generation VMEM plan ----
    vmem_limit = int(min(int(_physical_vmem_bytes() * 0.75), 112 << 20))
    plan_budget = max(vmem_limit - (4 << 20), 8 << 20)  # compiler-scratch headroom

    # ---- column (num_classes) tiling: only if the weight is too big to sit
    #      comfortably in VMEM ----
    w_full_bytes = F * C * w_bytes
    if 2 * w_full_bytes <= plan_budget // 2:
        tc, gc = C, 1
        # Single-buffer the grid-invariant weight when the second copy matters.
        single_buffer_weight = _HAS_PIPELINE_MODE and w_full_bytes > (2 << 20)
        w_vmem = w_full_bytes * (1 if single_buffer_weight else 2)
    else:
        tc = ((plan_budget // 2) // (2 * F * w_bytes)) // 128 * 128
        tc = int(max(128, tc))
        single_buffer_weight = False
        if tc >= C:
            tc, gc = C, 1
        else:
            gc = pl.cdiv(C, tc)
        w_vmem = 2 * F * tc * w_bytes

    # ---- row tiling from the remaining VMEM budget ----
    per_row = 2 * F * x_bytes + 2 * tc * o_bytes + tc * 4  # 2x in, 2x out, f32 acc
    rem = max(plan_budget - w_vmem - 2 * tc * 4, per_row * 8)
    tm_cap = max(8, min(4096, (rem // per_row) // 8 * 8))

    gm = pl.cdiv(n, tm_cap)
    if gm == 1 and n >= 512:
        gm = 2            # enough work to split across 2 TCs (v7x megacore)
    if gm > 1 and gm % 2:
        gm += 1           # even grid length -> balanced TC split on v7x
    if gm == 1:
        tm = n            # single full-extent block
    else:
        tm = _round_up(pl.cdiv(n, gm), 8)  # balanced tiles, no wasted trailing tile
        gm = pl.cdiv(n, tm)

    x_spec = pl.BlockSpec((tm, F), lambda i, j: (i, 0))
    if single_buffer_weight:
        w_spec = pl.BlockSpec((F, tc), lambda i, j: (0, j),
                              pipeline_mode=pl.Buffered(1))
    else:
        w_spec = pl.BlockSpec((F, tc), lambda i, j: (0, j))
    b_spec = pl.BlockSpec((1, tc), lambda i, j: (0, j))
    o_spec = pl.BlockSpec((tm, tc), lambda i, j: (i, j))

    out2d = pl.pallas_call(
        _linear_kernel,
        out_shape=jax.ShapeDtypeStruct((n, C), out_dtype),
        grid=(gm, gc),
        in_specs=[x_spec, w_spec, b_spec],
        out_specs=o_spec,
        compiler_params=pltpu.CompilerParams(
            # Row and class tiles are independent (F is not tiled): both axes
            # are parallel -> shard across TensorCores on megacore parts.
            dimension_semantics=("parallel", "parallel"),
            vmem_limit_bytes=vmem_limit,
        ),
    )(x2d, wt, b2d)

    return out2d.reshape(*lead, C)


def init_linear_params(key, in_features, out_features, dtype=jnp.float32):
    """Deterministic init mimicking torch.nn.Linear (uniform +-1/sqrt(fan_in))."""
    kw, kb = jax.random.split(key)
    bound = 1.0 / (in_features ** 0.5)
    weight = jax.random.uniform(
        kw, (out_features, in_features), dtype=dtype, minval=-bound, maxval=bound
    )
    bias = jax.random.uniform(
        kb, (out_features,), dtype=dtype, minval=-bound, maxval=bound
    )
    return weight, bias


if __name__ == "__main__":
    key = jax.random.PRNGKey(0)
    k_x, k_x2, k_p = jax.random.split(key, 3)

    feature_size = 32
    num_classes = 16

    # Only mlp_1 participates in the forward pass.
    mlp1_w, mlp1_b = init_linear_params(k_p, feature_size, num_classes)

    # Case 1: small input (single-tile path, n < 512).
    x_small = jax.random.normal(k_x, (2, 8, feature_size), dtype=jnp.float32)
    y_small = stream_classification_head_forward(x_small, mlp1_w, mlp1_b)
    jax.block_until_ready(y_small)
    ref_small = x_small @ mlp1_w.T + mlp1_b
    assert y_small.shape == (2, 8, num_classes)
    assert jnp.allclose(y_small, ref_small, atol=1e-5, rtol=1e-5)

    # Case 2: multi-tile path (n = 1200 -> two balanced 600-row tiles).
    x_big = jax.random.normal(k_x2, (3, 400, feature_size), dtype=jnp.float32)
    y_big = stream_classification_head_forward(x_big, mlp1_w, mlp1_b)
    jax.block_until_ready(y_big)
    ref_big = x_big @ mlp1_w.T + mlp1_b
    assert y_big.shape == (3, 400, num_classes)
    assert jnp.allclose(y_big, ref_big, atol=1e-4, rtol=1e-4)

    print("KERNEL_OK")
</pallas_src>

<mosaic_0001>
module attributes {stable_mosaic.version = 11 : i64} {
  func.func @_linear_kernel(%arg0: i32, %arg1: i32, %arg2: memref<16x32xf32, #tpu.memory_space<vmem>>, %arg3: memref<32x16xf32, #tpu.memory_space<vmem>>, %arg4: memref<1x16xf32, #tpu.memory_space<vmem>>, %arg5: memref<16x16xf32, #tpu.memory_space<vmem>>) attributes {dimension_semantics = [#tpu.dimension_semantics<parallel>, #tpu.dimension_semantics<parallel>], iteration_bounds = array<i64: 1, 1>, scalar_prefetch = 0 : i64, scratch_operands = 0 : i64, tpu.core_type = #tpu.core_type<tc>, window_params = [{transform_indices = @transform_0, window_bounds = array<i64: 16, 32>}, {transform_indices = @transform_1, window_bounds = array<i64: 32, 16>}, {transform_indices = @transform_2, window_bounds = array<i64: 1, 16>}, {transform_indices = @transform_3, window_bounds = array<i64: 16, 16>}]} {
    %c0 = arith.constant 0 : index
    %c0_0 = arith.constant 0 : index
    %0 = vector.load %arg2[%c0, %c0_0] : memref<16x32xf32, #tpu.memory_space<vmem>>, vector<16x32xf32>
    %c0_1 = arith.constant 0 : index
    %c0_2 = arith.constant 0 : index
    %1 = vector.load %arg3[%c0_1, %c0_2] : memref<32x16xf32, #tpu.memory_space<vmem>>, vector<32x16xf32>
    %cst = arith.constant dense<0.000000e+00> : vector<16x16xf32>
    %2 = tpu.matmul %0, %1, %cst {dimension_numbers = #tpu.dot_dimension_numbers<[1], [0], [0], [1], [0, 0, 1, 1], [], []>} : vector<16x32xf32>, vector<32x16xf32>, vector<16x16xf32> -> vector<16x16xf32>
    %c0_3 = arith.constant 0 : index
    %c0_4 = arith.constant 0 : index
    %3 = vector.load %arg4[%c0_3, %c0_4] : memref<1x16xf32, #tpu.memory_space<vmem>>, vector<1x16xf32>
    %4 = vector.broadcast %3 : vector<1x16xf32> to vector<16x16xf32>
    %5 = arith.addf %2, %4 : vector<16x16xf32>
    %c0_5 = arith.constant 0 : index
    %c0_6 = arith.constant 0 : index
    %6 = vector.load %arg5[%c0_5, %c0_6] : memref<16x16xf32, #tpu.memory_space<vmem>>, vector<16x16xf32>
    tpu.vector_store %arg5[%c0_5, %c0_6], %5 {strides = array<i32>} : memref<16x16xf32, #tpu.memory_space<vmem>>, vector<16x16xf32>,
    return
  }
  func.func @transform_0(%arg0: i32, %arg1: i32) -> (i32, i32) {
    %c0_i32 = arith.constant 0 : i32
    %c0_i32_0 = arith.constant 0 : i32
    return %arg0, %c0_i32 : i32, i32
  }
  func.func @transform_1(%arg0: i32, %arg1: i32) -> (i32, i32) {
    %c0_i32 = arith.constant 0 : i32
    %c0_i32_0 = arith.constant 0 : i32
    return %c0_i32, %arg1 : i32, i32
  }
  func.func @transform_2(%arg0: i32, %arg1: i32) -> (i32, i32) {
    %c0_i32 = arith.constant 0 : i32
    %c0_i32_0 = arith.constant 0 : i32
    return %c0_i32, %arg1 : i32, i32
  }
  func.func @transform_3(%arg0: i32, %arg1: i32) -> (i32, i32) {
    %c0_i32 = arith.constant 0 : i32
    return %arg0, %arg1 : i32, i32
  }
}

</mosaic_0001>

<llo_original>
// kernel: tpu_custom_call.1
$region0: #{tpu_custom_call.1}
  #allocation0 [shape = 'u32[]', space=smem, size = 0x4, offset = 0x4, fixed_abs, tag = 'smem constant byte address 0x4 - core index']
  #allocation1 [shape = 'u32[144,128]{1,0:T(1,128)}', space=vmem, size = 0x12000, scoped, tag = 'internal scratch']
  %s0 = inlined_call_operand.vmem [shape: f32[16,32], index: 0, kind: input, shape index: {}]
  %s1 = inlined_call_operand.vmem [shape: f32[32,16], index: 1, kind: input, shape index: {}]
  %s2 = inlined_call_operand.vmem [shape: f32[1,16], index: 2, kind: input, shape index: {}]
  %s3 = inlined_call_operand.hbm [shape: f32[16,16], index: 3, kind: output, shape index: {}]
  %s4 = sld [smem:[#allocation0]]
  $region22: #{tpu_custom_call.1} parent=0
    _
  %s6 = ssub.s32 1, %s4
  %s7 = scalar_select 0, %s6, %s4
  $region1: #{tpu_custom_call.1} parent=0
    #allocation2 [shape = 'u8[8192]{0}', space=vmem, size = 0x2000, scoped, tag = 'output window, operand 0, single buffered']
    #allocation3 [shape = 's32[1]{0}', space=sflag, size = 0x4, scoped, tag = 'scoped memory for tpu_custom_call.1']
    %8 = vsyncpa [#allocation3], 0
    // Predicated region
    $region2: #{tpu_custom_call.1} parent=1 // pred_check
      _
    $region3: #{tpu_custom_call.1} parent=1 // pred_check_branch
      %10 = sbr.rel (0) target = $region5
    $region4: #{tpu_custom_call.1} parent=1 // pred_region
      _
    $region5: #{tpu_custom_call.1} parent=1 // pred_fallthru
      _
    // Predicated region
    $region6: #{tpu_custom_call.1} parent=1 // pred_check
      _
    $region7: #{tpu_custom_call.1} parent=1 // pred_check_branch
      %12 = sbr.rel (0) target = $region9
    $region8: #{tpu_custom_call.1} parent=1 // pred_region
      _
    $region9: #{tpu_custom_call.1} parent=1 // pred_fallthru
      _
    // Predicated region
    $region10: #{tpu_custom_call.1} parent=1 // pred_check
      _
    $region11: #{tpu_custom_call.1} parent=1 // pred_check_branch
      %14 = sbr.rel (0) target = $region13
    $region12: #{tpu_custom_call.1} parent=1 // pred_region
      _
    $region13: #{tpu_custom_call.1} parent=1 // pred_fallthru
      _
    %v15 = vld [vmem:[%s0] sm:$0xff]
    %v16 = vld [vmem:[%s0 + $0x8] sm:$0xff]
    %v17 = vld [vmem:[%s1] sm:$0xff]
    %v18 = vld [vmem:[%s1 + $0x8] sm:$0xff]
    %v19 = vld [vmem:[%s1 + $0x10] sm:$0xff]
    %v20 = vld [vmem:[%s1 + $0x18] sm:$0xff]
    %v21 = vld [vmem:[%s2] sm:$0x1]
    %v23 = vlaneseq
    %v24 = vshrl.u32 %v23, 7
    %v25 = vsub.s32 0, %v24
    %v26 = vrot.slane %v21, %v25
    %vm28 = vcmask 261120
    %v30 = vsel %vm28, %v15, 0
    %v33 = vsel %vm28, %v16, 0
    %35 = vmatprep.subr.mxu0 0.0
    %36 = vmatpush1.msra.mxu0 %v17
    %37 = vmatprep.subr.mxu0 0.0
    %38 = vmatpush1.msra.mxu0 %v18
    %39 = vmatprep.subr.mxu0 0.0
    %40 = vmatpush1.msra.mxu0 %v19
    %41 = vmatprep.subr.mxu0 0.0
    %42 = vmatpush1.msra.mxu0 %v20
    %43 = vmatprep.subr.mxu0 0.0
    %44 = vmatpush1.msra.mxu0 0.0
    %45 = vmatprep.subr.mxu0 0.0
    %46 = vmatpush1.msra.mxu0 0.0
    %47 = vmatprep.subr.mxu0 0.0
    %48 = vmatpush1.msra.mxu0 0.0
    %49 = vmatprep.subr.mxu0 0.0
    %50 = vmatpush1.msra.mxu0 0.0
    %51 = vmatprep.subr.mxu0 0.0
    %52 = vmatpush1.msra.mxu0 0.0
    %53 = vmatprep.subr.mxu0 0.0
    %54 = vmatpush1.msra.mxu0 0.0
    %55 = vmatprep.subr.mxu0 0.0
    %56 = vmatpush1.msra.mxu0 0.0
    %57 = vmatprep.subr.mxu0 0.0
    %58 = vmatpush1.msra.mxu0 0.0
    %59 = vmatprep.subr.mxu0 0.0
    %60 = vmatpush1.msra.mxu0 0.0
    %61 = vmatprep.subr.mxu0 0.0
    %62 = vmatpush1.msra.mxu0 0.0
    %63 = vmatprep.subr.mxu0 0.0
    %64 = vmatpush1.msra.mxu0 0.0
    %65 = vmatprep.subr.mxu0 0.0
    %66 = vmatpush1.msra.mxu0 0.0
    %67 = vmatprep.subr.mxu0 0.0
    %68 = vmatpush1.msra.mxu0 0.0
    %69 = vmatprep.subr.mxu0 0.0
    %70 = vmatpush1.msra.mxu0 0.0
    %71 = vmatprep.subr.mxu0 0.0
    %72 = vmatpush1.msra.mxu0 0.0
    %73 = vmatprep.subr.mxu0 0.0
    %74 = vmatpush1.msra.mxu0 0.0
    %75 = vmatprep.subr.mxu0 0.0
    %76 = vmatpush1.msra.mxu0 0.0
    %77 = vmatprep.subr.mxu0 0.0
    %78 = vmatpush1.msra.mxu0 0.0
    %79 = vmatprep.subr.mxu0 0.0
    %80 = vmatpush1.msra.mxu0 0.0
    %81 = vmatprep.subr.mxu0 0.0
    %82 = vmatpush1.msra.mxu0 0.0
    %83 = vmatprep.subr.mxu0 0.0
    %84 = vmatpush1.msra.mxu0 0.0
    %85 = vmatprep.subr.mxu0 0.0
    %86 = vmatpush1.msra.mxu0 0.0
    %87 = vmatprep.subr.mxu0 0.0
    %88 = vmatpush1.msra.mxu0 0.0
    %89 = vmatprep.subr.mxu0 0.0
    %90 = vmatpush1.msra.mxu0 0.0
    %91 = vmatprep.subr.mxu0 0.0
    %92 = vmatpush1.msra.mxu0 0.0
    %93 = vmatprep.subr.mxu0 0.0
    %94 = vmatpush1.msra.mxu0 0.0
    %95 = vmatprep.subr.mxu0 0.0
    %96 = vmatpush1.msra.mxu0 0.0
    %97 = vmatprep.subr.mxu0 0.0
    %98 = vmatpush1.msra.mxu0 0.0
    %99 = vmatprep.mubr.f32.mxu0 0.0
    %100 = vmatmul.mubr.f32.gmra.mrb[0].mxu0 %v30
    %v101 = vpop.f32.mrb[0].mxu0
    %v102 = vadd.f32 %v26, %v101
    %v103 = vpop.f32.mrb[0].mxu0
    %104 = vmatprep.mubr.f32.mxu0 0.0
    %105 = vmatmul.mubr.f32.gmra.mrb[0].mxu0 %v33
    %v106 = vpop.f32.mrb[0].mxu0
    %v107 = vadd.f32 %v26, %v106
    %v108 = vpop.f32.mrb[0].mxu0
    %109 = vdwg.mxu0
    %vm110 = vcmask 130048
    %111 = vst.msk [vmem:[#allocation2] sm:$0xff] %vm110, %v102
    %112 = vst.msk [vmem:[#allocation2 + $0x8] sm:$0xff] %vm110, %v107
    // Predicated region
    $region14: #{tpu_custom_call.1} parent=1 // pred_check
      _
    $region15: #{tpu_custom_call.1} parent=1 // pred_check_branch
      %114 = sbr.rel (0) target = $region17
    $region16: #{tpu_custom_call.1} parent=1 // pred_region
      %s116 = ssub.s32 256, 256
      %117 = vsyncadd [#allocation3], %s116
      %s118 = sshll.u32 [#allocation2], 4
      %s119 = int_to_ptr.vmem [resolvable:$true] %s118
      %124 = dma.vmem_to_hbm [thread:$0]  %s119, 256, %s3, [#allocation3], 128, 128, 8
    $region17: #{tpu_custom_call.1} parent=1 // pred_fallthru
      _
    // Predicated region
    $region18: #{tpu_custom_call.1} parent=1 // pred_check
      _
    $region19: #{tpu_custom_call.1} parent=1 // pred_check_branch
      %126 = sbr.rel (0) target = $region21
    $region20: #{tpu_custom_call.1} parent=1 // pred_region
      %127 = dma.done [#allocation3], 256
    $region21: #{tpu_custom_call.1} parent=1 // pred_fallthru
      _
    %128 = vsyncpa [#allocation3], 1

</llo_original>
